<compile_context>
chip_gen: v7x
topology: tpu7x:2x2x1
jax: 0.10.0
libtpu: 0.0.40
codegen_flags: <defaults>
</compile_context>

<pallas_src>
import functools

import jax
import jax.numpy as jnp
from jax.experimental import pallas as pl
from jax.experimental.pallas import tpu as pltpu


def _round_up(a: int, m: int) -> int:
    return (a + m - 1) // m * m


def _vmem_capacity_bytes() -> int:
    """Physical per-core VMEM (fallback: 64 MiB, the most conservative chip)."""
    try:
        cap = int(pltpu.get_tpu_info().vmem_capacity_bytes)
        if cap >= (16 << 20):
            return cap
    except Exception:
        pass
    return 64 << 20


# --------------------------------------------------------------------------
# Kernels
# --------------------------------------------------------------------------
def _mlp_kernel_resident(x_ref, w1_ref, b1_ref, w3_ref, b3_ref, o_ref):
    """Weights fully resident in VMEM; grid = (batch_tiles,)."""
    # fc1 (MXU, f32 accumulation) -> bias + relu in the compute dtype
    x = x_ref[...].astype(w1_ref.dtype)            # in-kernel cast (hidden under MXU)
    h = jnp.dot(x, w1_ref[...], preferred_element_type=jnp.float32)
    h = jnp.maximum(h.astype(b1_ref.dtype) + b1_ref[...], 0.0).astype(w3_ref.dtype)
    # fc3 (MXU, f32 accumulation) -> bias + sigmoid epilogue in f32
    z = jnp.dot(h, w3_ref[...], preferred_element_type=jnp.float32)
    o_ref[...] = jax.nn.sigmoid(z + b3_ref[...]).astype(o_ref.dtype)


def _mlp_kernel_stream_acc(x_ref, w1_ref, b1_ref, w3_ref, b3_ref, o_ref, acc_ref):
    """Streaming weights; grid = (batch_tiles, hidden_tiles); f32 VMEM acc."""
    k = pl.program_id(1)

    @pl.when(k == 0)
    def _():
        acc_ref[...] = jnp.zeros_like(acc_ref)

    x = x_ref[...].astype(w1_ref.dtype)
    h = jnp.dot(x, w1_ref[...], preferred_element_type=jnp.float32)
    h = jnp.maximum(h.astype(b1_ref.dtype) + b1_ref[...], 0.0).astype(w3_ref.dtype)
    acc_ref[...] += jnp.dot(h, w3_ref[...], preferred_element_type=jnp.float32)

    @pl.when(k == pl.num_programs(1) - 1)
    def _():
        o_ref[...] = jax.nn.sigmoid(acc_ref[...] + b3_ref[...]).astype(o_ref.dtype)


def _mlp_kernel_stream_f32out(x_ref, w1_ref, b1_ref, w3_ref, b3_ref, o_ref):
    """Streaming weights, f32 output: accumulate directly into the resident
    output block (its block index is constant across k) -- no scratch."""
    k = pl.program_id(1)

    @pl.when(k == 0)
    def _():
        o_ref[...] = jnp.zeros_like(o_ref)

    x = x_ref[...].astype(w1_ref.dtype)
    h = jnp.dot(x, w1_ref[...], preferred_element_type=jnp.float32)
    h = jnp.maximum(h.astype(b1_ref.dtype) + b1_ref[...], 0.0).astype(w3_ref.dtype)
    o_ref[...] += jnp.dot(h, w3_ref[...], preferred_element_type=jnp.float32)

    @pl.when(k == pl.num_programs(1) - 1)
    def _():
        o_ref[...] = jax.nn.sigmoid(o_ref[...] + b3_ref[...])


# --------------------------------------------------------------------------
# Parameter preparation (one-time pad + cast; hoisted out of the hot path)
# --------------------------------------------------------------------------
def prepare_params(w1, b1, w3, b3, compute_dtype=jnp.bfloat16):
    """w1: (input_dim, hidden)  b1: (hidden,)  w3: (hidden, output_dim)  b3: (output_dim,).
    Pads feature dims to multiples of 128 and casts matmul operands to
    compute_dtype (default bf16; pass jnp.float32 for the exact path)."""
    cdt = jnp.dtype(compute_dtype)
    input_dim, hidden = w1.shape
    output_dim = w3.shape[1]
    in_pad = _round_up(input_dim, 128)
    hidden_pad = _round_up(hidden, 128)
    out_pad = _round_up(output_dim, 128)

    w1_p = jnp.pad(w1.astype(cdt), ((0, in_pad - input_dim), (0, hidden_pad - hidden)))
    b1_p = jnp.pad(b1.astype(cdt), ((0, hidden_pad - hidden),)).reshape(1, hidden_pad)
    w3_p = jnp.pad(w3.astype(cdt), ((0, hidden_pad - hidden), (0, out_pad - output_dim)))
    b3_p = jnp.pad(b3.astype(jnp.float32), ((0, out_pad - output_dim),)).reshape(1, out_pad)
    return {"w1": w1_p, "b1": b1_p, "w3": w3_p, "b3": b3_p, "output_dim": output_dim}


# --------------------------------------------------------------------------
# Forward
# --------------------------------------------------------------------------
@functools.partial(jax.jit, static_argnames=("output_dim", "force_stream"))
def _mlp_vec_padded(x, w1_p, b1_p, w3_p, b3_p, *, output_dim, force_stream=False):
    B, input_dim = x.shape
    in_pad, hidden_pad = w1_p.shape
    out_pad = w3_p.shape[1]
    out_dtype = x.dtype
    cdt = w1_p.dtype

    xb = jnp.dtype(x.dtype).itemsize
    cb = jnp.dtype(cdt).itemsize
    ob = jnp.dtype(out_dtype).itemsize
    out_is_f32 = jnp.dtype(out_dtype) == jnp.dtype(jnp.float32)
    sub = 16 if xb < 4 else 8                       # sublane multiple for x/out blocks

    cap = _vmem_capacity_bytes()
    budget = max(cap - (16 << 20), cap // 2)        # planning budget with headroom

    # ---- resident-weight feasibility (weights double-buffer-allocated) -----
    w_res_bytes = (2 * (in_pad * hidden_pad + hidden_pad * out_pad) * cb
                   + 2 * hidden_pad * cb + 2 * out_pad * 4)

    def resident_bytes(bb):
        return (w_res_bytes
                + 2 * bb * in_pad * xb              # x tiles (original dtype, cast in-kernel)
                + 2 * bb * out_pad * ob             # out tiles
                + bb * hidden_pad * (4 + cb))       # fc1 intermediate headroom

    use_resident = (not force_stream) and resident_bytes(sub) <= budget

    # ---- streaming tile sizes ----------------------------------------------
    th = 128
    for cand in (512, 256):
        if hidden_pad % cand == 0:
            th = cand
            break

    def stream_bytes(bb):
        return (2 * bb * in_pad * xb
                + 2 * in_pad * th * cb              # W1 tiles
                + 2 * th * cb                       # b1 tiles
                + 2 * th * out_pad * cb             # W3 tiles
                + 2 * out_pad * 4                   # b3
                + 2 * bb * out_pad * ob             # out tiles
                + (0 if out_is_f32 else bb * out_pad * 4)   # f32 acc scratch
                + bb * th * (4 + cb))               # fc1 intermediate headroom

    fits = resident_bytes if use_resident else stream_bytes

    # ---- choose block_b: largest batch tile that fits the VMEM budget ------
    cap_bb = _round_up(B, sub)
    lim = min(2048, cap_bb)
    cands, bb = [], sub
    while bb < lim:
        cands.append(bb)
        bb *= 2
    cands.append(lim)

    block_b = sub
    for c in cands:
        if fits(c):
            block_b = max(block_b, c)
    B_pad = _round_up(B, block_b)

    # v7x megacore: make sure the parallel batch axis has >= 2 tiles.
    if B_pad // block_b == 1 and block_b >= 2 * sub and (block_b // 2) % sub == 0:
        block_b //= 2
        B_pad = _round_up(B, block_b)
    nb = B_pad // block_b

    # ---- pad x (no wrapper cast; cast happens inside the kernel) -----------
    x_p = jnp.pad(x, ((0, B_pad - B), (0, in_pad - input_dim)))

    flops = 2 * B_pad * (in_pad * hidden_pad + hidden_pad * out_pad)
    weight_bytes = w1_p.size * cb + w3_p.size * cb + b1_p.size * cb + b3_p.size * 4

    if use_resident:
        need = resident_bytes(block_b)
        vmem_limit = int(min(need + need // 4 + (2 << 20), cap - (2 << 20)))
        cost = pl.CostEstimate(
            flops=flops,
            transcendentals=B_pad * out_pad,
            bytes_accessed=x_p.size * xb + weight_bytes + B_pad * out_pad * ob,
        )
        out_padded = pl.pallas_call(
            _mlp_kernel_resident,
            out_shape=jax.ShapeDtypeStruct((B_pad, out_pad), out_dtype),
            grid_spec=pltpu.PrefetchScalarGridSpec(
                num_scalar_prefetch=0,
                grid=(nb,),
                in_specs=[
                    pl.BlockSpec((block_b, in_pad), lambda i: (i, 0)),       # x tile
                    pl.BlockSpec((in_pad, hidden_pad), lambda i: (0, 0)),    # W1 resident
                    pl.BlockSpec((1, hidden_pad), lambda i: (0, 0)),         # b1 resident
                    pl.BlockSpec((hidden_pad, out_pad), lambda i: (0, 0)),   # W3 resident
                    pl.BlockSpec((1, out_pad), lambda i: (0, 0)),            # b3 resident
                ],
                out_specs=pl.BlockSpec((block_b, out_pad), lambda i: (i, 0)),
            ),
            compiler_params=pltpu.CompilerParams(
                dimension_semantics=("parallel",),
                vmem_limit_bytes=vmem_limit,
            ),
            cost_estimate=cost,
        )(x_p, w1_p, b1_p, w3_p, b3_p)
    else:
        nk = hidden_pad // th
        need = stream_bytes(block_b)
        vmem_limit = int(min(need + need // 4 + (2 << 20), cap - (2 << 20)))
        cost = pl.CostEstimate(
            flops=flops,
            transcendentals=B_pad * out_pad,
            bytes_accessed=x_p.size * xb + nb * weight_bytes + B_pad * out_pad * ob,
        )
        kernel = _mlp_kernel_stream_f32out if out_is_f32 else _mlp_kernel_stream_acc
        scratch = [] if out_is_f32 else [pltpu.VMEM((block_b, out_pad), jnp.float32)]
        out_padded = pl.pallas_call(
            kernel,
            out_shape=jax.ShapeDtypeStruct((B_pad, out_pad), out_dtype),
            grid_spec=pltpu.PrefetchScalarGridSpec(
                num_scalar_prefetch=0,
                grid=(nb, nk),
                in_specs=[
                    pl.BlockSpec((block_b, in_pad), lambda i, k: (i, 0)),    # x tile
                    pl.BlockSpec((in_pad, th), lambda i, k: (0, k)),         # W1 tile
                    pl.BlockSpec((1, th), lambda i, k: (0, k)),              # b1 tile
                    pl.BlockSpec((th, out_pad), lambda i, k: (k, 0)),        # W3 tile
                    pl.BlockSpec((1, out_pad), lambda i, k: (0, 0)),         # b3
                ],
                out_specs=pl.BlockSpec((block_b, out_pad), lambda i, k: (i, 0)),
                scratch_shapes=scratch,
            ),
            compiler_params=pltpu.CompilerParams(
                dimension_semantics=("parallel", "arbitrary"),
                vmem_limit_bytes=vmem_limit,
            ),
            cost_estimate=cost,
        )(x_p, w1_p, b1_p, w3_p, b3_p)

    return out_padded[:B, :output_dim]


def mlp_vec_forward(x, params, force_stream=False):
    """x: (B, input_dim); params: output of prepare_params."""
    return _mlp_vec_padded(
        x, params["w1"], params["b1"], params["w3"], params["b3"],
        output_dim=params["output_dim"], force_stream=force_stream)


# --------------------------------------------------------------------------
# PyTorch-style init (for the demo)
# --------------------------------------------------------------------------
def init_params(key, input_dim, hidden, output_dim, dtype=jnp.float32):
    """nn.Linear-style init: U(-k, k) with k = 1/sqrt(fan_in)."""
    k1, k2, k3, k4, k5, k6 = jax.random.split(key, 6)
    lim1 = 1.0 / jnp.sqrt(jnp.asarray(input_dim, dtype))
    lim3 = 1.0 / jnp.sqrt(jnp.asarray(hidden, dtype))
    # stored as (in, out) == W^T so the kernel computes x @ W
    w1 = jax.random.uniform(k1, (input_dim, hidden), dtype, -lim1, lim1)
    b1 = jax.random.uniform(k2, (hidden,), dtype, -lim1, lim1)
    w3 = jax.random.uniform(k3, (hidden, output_dim), dtype, -lim3, lim3)
    b3 = jax.random.uniform(k4, (output_dim,), dtype, -lim3, lim3)
    # fc2 exists in the module's __init__ but is unused in forward(); parity only.
    _w2 = jax.random.uniform(k5, (hidden, hidden), dtype, -lim3, lim3)
    _b2 = jax.random.uniform(k6, (hidden,), dtype, -lim3, lim3)
    return w1, b1, w3, b3


if __name__ == "__main__":
    key = jax.random.PRNGKey(0)
    batch, input_dim, hidden, output_dim = 8, 16, 32, 8

    kx, kp = jax.random.split(key)
    x = jax.random.normal(kx, (batch, input_dim), jnp.float32)
    w1, b1, w3, b3 = init_params(kp, input_dim, hidden, output_dim)

    ref = jax.nn.sigmoid(jnp.maximum(x @ w1 + b1, 0.0) @ w3 + b3)

    # Default fast path: bf16 MXU inputs, f32 accumulation, resident weights.
    params_bf16 = prepare_params(w1, b1, w3, b3, compute_dtype=jnp.bfloat16)
    out = jax.block_until_ready(mlp_vec_forward(x, params_bf16))
    assert out.shape == (batch, output_dim)
    assert jnp.allclose(out, ref, atol=3e-2, rtol=3e-2)

    # Exact f32 path (matches the PyTorch module's numerics).
    params_f32 = prepare_params(w1, b1, w3, b3, compute_dtype=jnp.float32)
    out32 = jax.block_until_ready(mlp_vec_forward(x, params_f32))
    assert out32.shape == (batch, output_dim)
    assert jnp.allclose(out32, ref, atol=2e-5, rtol=1e-4)

    # Streaming fallback path (used when weights exceed VMEM) -- exercised here
    # explicitly for coverage.
    out_s = jax.block_until_ready(mlp_vec_forward(x, params_f32, force_stream=True))
    assert jnp.allclose(out_s, ref, atol=2e-5, rtol=1e-4)

    print("KERNEL_OK")
</pallas_src>

<mosaic_0001>
module attributes {stable_mosaic.version = 11 : i64} {
  func.func @_mlp_kernel_resident(%arg0: i32, %arg1: memref<8x128xf32, #tpu.memory_space<vmem>>, %arg2: memref<128x128xbf16, #tpu.memory_space<vmem>>, %arg3: memref<1x128xbf16, #tpu.memory_space<vmem>>, %arg4: memref<128x128xbf16, #tpu.memory_space<vmem>>, %arg5: memref<1x128xf32, #tpu.memory_space<vmem>>, %arg6: memref<8x128xf32, #tpu.memory_space<vmem>>) attributes {dimension_semantics = [#tpu.dimension_semantics<parallel>], iteration_bounds = array<i64: 1>, scalar_prefetch = 0 : i64, scratch_operands = 0 : i64, tpu.core_type = #tpu.core_type<tc>, window_params = [{transform_indices = @transform_0, window_bounds = array<i64: 8, 128>}, {pipeline_mode = #tpu.pipeline_mode<synchronous>, transform_indices = @transform_1, window_bounds = array<i64: 128, 128>}, {pipeline_mode = #tpu.pipeline_mode<synchronous>, transform_indices = @transform_2, window_bounds = array<i64: 1, 128>}, {pipeline_mode = #tpu.pipeline_mode<synchronous>, transform_indices = @transform_3, window_bounds = array<i64: 128, 128>}, {pipeline_mode = #tpu.pipeline_mode<synchronous>, transform_indices = @transform_4, window_bounds = array<i64: 1, 128>}, {transform_indices = @transform_5, window_bounds = array<i64: 8, 128>}]} {
    %c0 = arith.constant 0 : index
    %c0_0 = arith.constant 0 : index
    %0 = vector.load %arg1[%c0, %c0_0] : memref<8x128xf32, #tpu.memory_space<vmem>>, vector<8x128xf32>
    %1 = arith.truncf %0 : vector<8x128xf32> to vector<8x128xbf16>
    %c0_1 = arith.constant 0 : index
    %c0_2 = arith.constant 0 : index
    %2 = vector.load %arg2[%c0_1, %c0_2] : memref<128x128xbf16, #tpu.memory_space<vmem>>, vector<128x128xbf16>
    %cst = arith.constant dense<0.000000e+00> : vector<8x128xf32>
    %3 = tpu.matmul %1, %2, %cst {dimension_numbers = #tpu.dot_dimension_numbers<[1], [0], [0], [1], [0, 0, 1, 1], [], []>} : vector<8x128xbf16>, vector<128x128xbf16>, vector<8x128xf32> -> vector<8x128xf32>
    %4 = arith.truncf %3 : vector<8x128xf32> to vector<8x128xbf16>
    %c0_3 = arith.constant 0 : index
    %c0_4 = arith.constant 0 : index
    %5 = vector.load %arg3[%c0_3, %c0_4] : memref<1x128xbf16, #tpu.memory_space<vmem>>, vector<1x128xbf16>
    %6 = vector.broadcast %5 : vector<1x128xbf16> to vector<8x128xbf16>
    %7 = arith.addf %4, %6 : vector<8x128xbf16>
    %cst_5 = arith.constant 0.000000e+00 : bf16
    %8 = vector.broadcast %cst_5 : bf16 to vector<8x128xbf16>
    %9 = arith.maximumf %7, %8 : vector<8x128xbf16>
    %c0_6 = arith.constant 0 : index
    %c0_7 = arith.constant 0 : index
    %10 = vector.load %arg4[%c0_6, %c0_7] : memref<128x128xbf16, #tpu.memory_space<vmem>>, vector<128x128xbf16>
    %cst_8 = arith.constant dense<0.000000e+00> : vector<8x128xf32>
    %11 = tpu.matmul %9, %10, %cst_8 {dimension_numbers = #tpu.dot_dimension_numbers<[1], [0], [0], [1], [0, 0, 1, 1], [], []>} : vector<8x128xbf16>, vector<128x128xbf16>, vector<8x128xf32> -> vector<8x128xf32>
    %c0_9 = arith.constant 0 : index
    %c0_10 = arith.constant 0 : index
    %12 = vector.load %arg5[%c0_9, %c0_10] : memref<1x128xf32, #tpu.memory_space<vmem>>, vector<1x128xf32>
    %13 = vector.broadcast %12 : vector<1x128xf32> to vector<8x128xf32>
    %14 = arith.addf %11, %13 : vector<8x128xf32>
    %15 = arith.negf %14 : vector<8x128xf32>
    %16 = math.exp %15 : vector<8x128xf32>
    %cst_11 = arith.constant 1.000000e+00 : f32
    %17 = vector.broadcast %cst_11 : f32 to vector<8x128xf32>
    %18 = arith.addf %17, %16 : vector<8x128xf32>
    %19 = arith.divf %17, %18 : vector<8x128xf32>
    %c0_12 = arith.constant 0 : index
    %c0_13 = arith.constant 0 : index
    %20 = vector.load %arg6[%c0_12, %c0_13] : memref<8x128xf32, #tpu.memory_space<vmem>>, vector<8x128xf32>
    tpu.vector_store %arg6[%c0_12, %c0_13], %19 {strides = array<i32>} : memref<8x128xf32, #tpu.memory_space<vmem>>, vector<8x128xf32>,
    return
  }
  func.func @transform_0(%arg0: i32) -> (i32, i32) {
    %c0_i32 = arith.constant 0 : i32
    %c0_i32_0 = arith.constant 0 : i32
    return %arg0, %c0_i32 : i32, i32
  }
  func.func @transform_1(%arg0: i32) -> (i32, i32) {
    %c0_i32 = arith.constant 0 : i32
    %c0_i32_0 = arith.constant 0 : i32
    %c0_i32_1 = arith.constant 0 : i32
    return %c0_i32, %c0_i32_0 : i32, i32
  }
  func.func @transform_2(%arg0: i32) -> (i32, i32) {
    %c0_i32 = arith.constant 0 : i32
    %c0_i32_0 = arith.constant 0 : i32
    %c0_i32_1 = arith.constant 0 : i32
    return %c0_i32, %c0_i32_0 : i32, i32
  }
  func.func @transform_3(%arg0: i32) -> (i32, i32) {
    %c0_i32 = arith.constant 0 : i32
    %c0_i32_0 = arith.constant 0 : i32
    %c0_i32_1 = arith.constant 0 : i32
    return %c0_i32, %c0_i32_0 : i32, i32
  }
  func.func @transform_4(%arg0: i32) -> (i32, i32) {
    %c0_i32 = arith.constant 0 : i32
    %c0_i32_0 = arith.constant 0 : i32
    %c0_i32_1 = arith.constant 0 : i32
    return %c0_i32, %c0_i32_0 : i32, i32
  }
  func.func @transform_5(%arg0: i32) -> (i32, i32) {
    %c0_i32 = arith.constant 0 : i32
    %c0_i32_0 = arith.constant 0 : i32
    return %arg0, %c0_i32 : i32, i32
  }
}

</mosaic_0001>

<llo_original>
// kernel: _mlp_vec_padded.1
$region0: #{_mlp_vec_padded.1}
  #allocation0 [shape = 'u32[]', space=smem, size = 0x4, offset = 0x4, fixed_abs, tag = 'smem constant byte address 0x4 - core index']
  #allocation1 [shape = 'u32[144,128]{1,0:T(1,128)}', space=vmem, size = 0x12000, scoped, tag = 'internal scratch']
  %s0 = inlined_call_operand.vmem [shape: f32[8,128], index: 0, kind: input, shape index: {}]
  %s1 = inlined_call_operand.hbm [shape: bf16[128,128], index: 1, kind: input, shape index: {}]
  %s2 = inlined_call_operand.vmem [shape: bf16[1,128], index: 2, kind: input, shape index: {}]
  %s3 = inlined_call_operand.hbm [shape: bf16[128,128], index: 3, kind: input, shape index: {}]
  %s4 = inlined_call_operand.vmem [shape: f32[1,128], index: 4, kind: input, shape index: {}]
  %s5 = inlined_call_operand.hbm [shape: f32[8,128], index: 5, kind: output, shape index: {}]
  %s6 = sld [smem:[#allocation0]]
  $region38: #{_mlp_vec_padded.1} parent=0
    _
  %s8 = ssub.s32 1, %s6
  %s9 = scalar_select 0, %s8, %s6
  $region1: #{_mlp_vec_padded.1} parent=0
    #allocation2 [shape = 'u8[32768]{0}', space=vmem, size = 0x8000, scoped, tag = 'input window, operand 1, single buffered']
    #allocation3 [shape = 's32[1]{0}', space=sflag, size = 0x4, scoped, tag = 'scoped memory for _mlp_vec_padded.1']
    #allocation4 [shape = 's32[1]{0}', space=sflag, size = 0x4, scoped, tag = 'scoped memory for _mlp_vec_padded.1']
    #allocation5 [shape = 'u8[32768]{0}', space=vmem, size = 0x8000, scoped, tag = 'input window, operand 3, single buffered']
    #allocation6 [shape = 's32[1]{0}', space=sflag, size = 0x4, scoped, tag = 'scoped memory for _mlp_vec_padded.1']
    #allocation7 [shape = 'u8[4096]{0}', space=vmem, size = 0x1000, scoped, tag = 'output window, operand 0, single buffered']
    %10 = vsyncpa [#allocation3], 0
    %11 = vsyncpa [#allocation6], 0
    %12 = vsyncpa [#allocation4], 0
    // Predicated region
    $region2: #{_mlp_vec_padded.1} parent=1 // pred_check
      _
    $region3: #{_mlp_vec_padded.1} parent=1 // pred_check_branch
      %14 = sbr.rel (0) target = $region5
    $region4: #{_mlp_vec_padded.1} parent=1 // pred_region
      _
    $region5: #{_mlp_vec_padded.1} parent=1 // pred_fallthru
      _
    // Predicated region
    $region6: #{_mlp_vec_padded.1} parent=1 // pred_check
      _
    $region7: #{_mlp_vec_padded.1} parent=1 // pred_check_branch
      %16 = sbr.rel (0) target = $region9
    $region8: #{_mlp_vec_padded.1} parent=1 // pred_region
      %s18 = ssub.s32 1024, 1024
      %19 = vsyncadd [#allocation3], %s18
      %s20 = sshll.u32 [#allocation2], 4
      %s21 = int_to_ptr.vmem [resolvable:$true] %s20
      %26 = dma.hbm_to_vmem [thread:$0]  %s1, 1024, %s21, [#allocation3], 64, 64, 4
    $region9: #{_mlp_vec_padded.1} parent=1 // pred_fallthru
      _
    // Predicated region
    $region10: #{_mlp_vec_padded.1} parent=1 // pred_check
      _
    $region11: #{_mlp_vec_padded.1} parent=1 // pred_check_branch
      %28 = sbr.rel (0) target = $region13
    $region12: #{_mlp_vec_padded.1} parent=1 // pred_region
      _
    $region13: #{_mlp_vec_padded.1} parent=1 // pred_fallthru
      _
    // Predicated region
    $region14: #{_mlp_vec_padded.1} parent=1 // pred_check
      _
    $region15: #{_mlp_vec_padded.1} parent=1 // pred_check_branch
      %30 = sbr.rel (0) target = $region17
    $region16: #{_mlp_vec_padded.1} parent=1 // pred_region
      %s32 = ssub.s32 1024, 1024
      %33 = vsyncadd [#allocation6], %s32
      %s34 = sshll.u32 [#allocation5], 4
      %s35 = int_to_ptr.vmem [resolvable:$true] %s34
      %40 = dma.hbm_to_vmem [thread:$0]  %s3, 1024, %s35, [#allocation6], 64, 64, 4
    $region17: #{_mlp_vec_padded.1} parent=1 // pred_fallthru
      _
    // Predicated region
    $region18: #{_mlp_vec_padded.1} parent=1 // pred_check
      _
    $region19: #{_mlp_vec_padded.1} parent=1 // pred_check_branch
      %42 = sbr.rel (0) target = $region21
    $region20: #{_mlp_vec_padded.1} parent=1 // pred_region
      _
    $region21: #{_mlp_vec_padded.1} parent=1 // pred_fallthru
      _
    // Predicated region
    $region22: #{_mlp_vec_padded.1} parent=1 // pred_check
      _
    $region23: #{_mlp_vec_padded.1} parent=1 // pred_check_branch
      %44 = sbr.rel (0) target = $region25
    $region24: #{_mlp_vec_padded.1} parent=1 // pred_region
      %45 = dma.done [#allocation3], 1024
    $region25: #{_mlp_vec_padded.1} parent=1 // pred_fallthru
      _
    // Predicated region
    $region26: #{_mlp_vec_padded.1} parent=1 // pred_check
      _
    $region27: #{_mlp_vec_padded.1} parent=1 // pred_check_branch
      %47 = sbr.rel (0) target = $region29
    $region28: #{_mlp_vec_padded.1} parent=1 // pred_region
      %48 = dma.done [#allocation6], 1024
    $region29: #{_mlp_vec_padded.1} parent=1 // pred_fallthru
      _
    %v50 = vld [vmem:[%s0] sm:$0xff]
    %v51 = vpack.c.bf16 %v50, %v50
    %v52 = vld [vmem:[#allocation2] sm:$0xf]
    %v53 = vld [vmem:[#allocation2 + $0x4] sm:$0xf]
    %v54 = vld [vmem:[#allocation2 + $0x8] sm:$0xf]
    %v55 = vld [vmem:[#allocation2 + $0xc] sm:$0xf]
    %v56 = vld [vmem:[#allocation2 + $0x10] sm:$0xf]
    %v57 = vld [vmem:[#allocation2 + $0x14] sm:$0xf]
    %v58 = vld [vmem:[#allocation2 + $0x18] sm:$0xf]
    %v59 = vld [vmem:[#allocation2 + $0x1c] sm:$0xf]
    %v60 = vld [vmem:[#allocation2 + $0x20] sm:$0xf]
    %v61 = vld [vmem:[#allocation2 + $0x24] sm:$0xf]
    %v62 = vld [vmem:[#allocation2 + $0x28] sm:$0xf]
    %v63 = vld [vmem:[#allocation2 + $0x2c] sm:$0xf]
    %v64 = vld [vmem:[#allocation2 + $0x30] sm:$0xf]
    %v65 = vld [vmem:[#allocation2 + $0x34] sm:$0xf]
    %v66 = vld [vmem:[#allocation2 + $0x38] sm:$0xf]
    %v67 = vld [vmem:[#allocation2 + $0x3c] sm:$0xf]
    %v84 = vunpack.c.l.b16 %v52
    %v85 = vunpack.c.l.b16 %v53
    %v86 = vunpack.c.l.b16 %v54
    %v87 = vunpack.c.l.b16 %v55
    %v88 = vunpack.c.l.b16 %v56
    %v89 = vunpack.c.l.b16 %v57
    %v90 = vunpack.c.l.b16 %v58
    %v91 = vunpack.c.l.b16 %v59
    %v92 = vunpack.c.l.b16 %v60
    %v93 = vunpack.c.l.b16 %v61
    %v94 = vunpack.c.l.b16 %v62
    %v95 = vunpack.c.l.b16 %v63
    %v96 = vunpack.c.l.b16 %v64
    %v97 = vunpack.c.l.b16 %v65
    %v98 = vunpack.c.l.b16 %v66
    %v99 = vunpack.c.l.b16 %v67
    %v100 = vpack.c.b16 %v85, %v84
    %v101 = vpack.c.b16 %v87, %v86
    %v102 = vpack.c.b16 %v89, %v88
    %v103 = vpack.c.b16 %v91, %v90
    %v104 = vpack.c.b16 %v93, %v92
    %v105 = vpack.c.b16 %v95, %v94
    %v106 = vpack.c.b16 %v97, %v96
    %v107 = vpack.c.b16 %v99, %v98
    %116 = vmatprep.subr.bf16.mxu0 0
    %117 = vmatpush1.bf16.msra.mxu0 %v100
    %118 = vmatprep.subr.bf16.mxu0 0
    %119 = vmatpush1.bf16.msra.mxu0 %v101
    %120 = vmatprep.subr.bf16.mxu0 0
    %121 = vmatpush1.bf16.msra.mxu0 %v102
    %122 = vmatprep.subr.bf16.mxu0 0
    %123 = vmatpush1.bf16.msra.mxu0 %v103
    %124 = vmatprep.subr.bf16.mxu0 0
    %125 = vmatpush1.bf16.msra.mxu0 %v104
    %126 = vmatprep.subr.bf16.mxu0 0
    %127 = vmatpush1.bf16.msra.mxu0 %v105
    %128 = vmatprep.subr.bf16.mxu0 0
    %129 = vmatpush1.bf16.msra.mxu0 %v106
    %130 = vmatprep.subr.bf16.mxu0 0
    %131 = vmatpush1.bf16.msra.mxu0 %v107
    %132 = vmatprep.subr.bf16.mxu0 0
    %133 = vmatpush1.bf16.msra.mxu0 0
    %134 = vmatprep.subr.bf16.mxu0 0
    %135 = vmatpush1.bf16.msra.mxu0 0
    %136 = vmatprep.subr.bf16.mxu0 0
    %137 = vmatpush1.bf16.msra.mxu0 0
    %138 = vmatprep.subr.bf16.mxu0 0
    %139 = vmatpush1.bf16.msra.mxu0 0
    %140 = vmatprep.subr.bf16.mxu0 0
    %141 = vmatpush1.bf16.msra.mxu0 0
    %142 = vmatprep.subr.bf16.mxu0 0
    %143 = vmatpush1.bf16.msra.mxu0 0
    %144 = vmatprep.subr.bf16.mxu0 0
    %145 = vmatpush1.bf16.msra.mxu0 0
    %146 = vmatprep.subr.bf16.mxu0 0
    %147 = vmatpush1.bf16.msra.mxu0 0
    %148 = vmatprep.mubr.bf16.mxu0 0
    %149 = vmatmul.mubr.bf16.gmra.mrb[0].mxu0 %v51
    %v150 = vpop.f32.mrb[0].mxu0
    %v151 = vadd.f32 0.0, %v150
    %v152 = vpop.f32.mrb[0].mxu0
    %v153 = vpop.f32.mrb[0].mxu0
    %v154 = vpop.f32.mrb[0].mxu0
    %155 = vdwg.mxu0
    %v156 = vpack.c.bf16 %v151, %v151
    %v157 = vld [vmem:[%s2] sm:$0x1]
    %v159 = vpack.i.b16 %v157, %v157
    %v161 = vlaneseq
    %v162 = vshrl.u32 %v161, 7
    %v163 = vsub.s32 0, %v162
    %v164 = vrot.slane %v159, %v163
    %v165 = vadd.bf16 %v156, %v164
    %v166 = vmax.bf16 %v165, 0
    %v167 = vld [vmem:[#allocation5] sm:$0xf]
    %v168 = vld [vmem:[#allocation5 + $0x4] sm:$0xf]
    %v169 = vld [vmem:[#allocation5 + $0x8] sm:$0xf]
    %v170 = vld [vmem:[#allocation5 + $0xc] sm:$0xf]
    %v171 = vld [vmem:[#allocation5 + $0x10] sm:$0xf]
    %v172 = vld [vmem:[#allocation5 + $0x14] sm:$0xf]
    %v173 = vld [vmem:[#allocation5 + $0x18] sm:$0xf]
    %v174 = vld [vmem:[#allocation5 + $0x1c] sm:$0xf]
    %v175 = vld [vmem:[#allocation5 + $0x20] sm:$0xf]
    %v176 = vld [vmem:[#allocation5 + $0x24] sm:$0xf]
    %v177 = vld [vmem:[#allocation5 + $0x28] sm:$0xf]
    %v178 = vld [vmem:[#allocation5 + $0x2c] sm:$0xf]
    %v179 = vld [vmem:[#allocation5 + $0x30] sm:$0xf]
    %v180 = vld [vmem:[#allocation5 + $0x34] sm:$0xf]
    %v181 = vld [vmem:[#allocation5 + $0x38] sm:$0xf]
    %v182 = vld [vmem:[#allocation5 + $0x3c] sm:$0xf]
    %v183 = vld [vmem:[%s4] sm:$0x1]
    %v185 = vlaneseq
    %v186 = vshrl.u32 %v185, 7
    %v187 = vsub.s32 0, %v186
    %v188 = vrot.slane %v183, %v187
    %v206 = vunpack.c.l.b16 %v167
    %v207 = vunpack.c.l.b16 %v168
    %v208 = vunpack.c.l.b16 %v169
    %v209 = vunpack.c.l.b16 %v170
    %v210 = vunpack.c.l.b16 %v171
    %v211 = vunpack.c.l.b16 %v172
    %v212 = vunpack.c.l.b16 %v173
    %v213 = vunpack.c.l.b16 %v174
    %v214 = vunpack.c.l.b16 %v175
    %v215 = vunpack.c.l.b16 %v176
    %v216 = vunpack.c.l.b16 %v177
    %v217 = vunpack.c.l.b16 %v178
    %v218 = vunpack.c.l.b16 %v179
    %v219 = vunpack.c.l.b16 %v180
    %v220 = vunpack.c.l.b16 %v181
    %v221 = vunpack.c.l.b16 %v182
    %v222 = vpack.c.b16 %v207, %v206
    %v223 = vpack.c.b16 %v209, %v208
    %v224 = vpack.c.b16 %v211, %v210
    %v225 = vpack.c.b16 %v213, %v212
    %v226 = vpack.c.b16 %v215, %v214
    %v227 = vpack.c.b16 %v217, %v216
    %v228 = vpack.c.b16 %v219, %v218
    %v229 = vpack.c.b16 %v221, %v220
    %238 = vmatprep.subr.bf16.mxu0 0
    %239 = vmatpush1.bf16.msra.mxu0 %v222
    %240 = vmatprep.subr.bf16.mxu0 0
    %241 = vmatpush1.bf16.msra.mxu0 %v223
    %242 = vmatprep.subr.bf16.mxu0 0
    %243 = vmatpush1.bf16.msra.mxu0 %v224
    %244 = vmatprep.subr.bf16.mxu0 0
    %245 = vmatpush1.bf16.msra.mxu0 %v225
    %246 = vmatprep.subr.bf16.mxu0 0
    %247 = vmatpush1.bf16.msra.mxu0 %v226
    %248 = vmatprep.subr.bf16.mxu0 0
    %249 = vmatpush1.bf16.msra.mxu0 %v227
    %250 = vmatprep.subr.bf16.mxu0 0
    %251 = vmatpush1.bf16.msra.mxu0 %v228
    %252 = vmatprep.subr.bf16.mxu0 0
    %253 = vmatpush1.bf16.msra.mxu0 %v229
    %254 = vmatprep.subr.bf16.mxu0 0
    %255 = vmatpush1.bf16.msra.mxu0 0
    %256 = vmatprep.subr.bf16.mxu0 0
    %257 = vmatpush1.bf16.msra.mxu0 0
    %258 = vmatprep.subr.bf16.mxu0 0
    %259 = vmatpush1.bf16.msra.mxu0 0
    %260 = vmatprep.subr.bf16.mxu0 0
    %261 = vmatpush1.bf16.msra.mxu0 0
    %262 = vmatprep.subr.bf16.mxu0 0
    %263 = vmatpush1.bf16.msra.mxu0 0
    %264 = vmatprep.subr.bf16.mxu0 0
    %265 = vmatpush1.bf16.msra.mxu0 0
    %266 = vmatprep.subr.bf16.mxu0 0
    %267 = vmatpush1.bf16.msra.mxu0 0
    %268 = vmatprep.subr.bf16.mxu0 0
    %269 = vmatpush1.bf16.msra.mxu0 0
    %270 = vmatprep.mubr.bf16.mxu0 0
    %271 = vmatmul.mubr.bf16.gmra.mrb[0].mxu0 %v166
    %v272 = vpop.f32.mrb[0].mxu0
    %v273 = vadd.f32 %v188, %v272
    %v274 = vpop.f32.mrb[0].mxu0
    %v275 = vpop.f32.mrb[0].mxu0
    %v276 = vpop.f32.mrb[0].mxu0
    %277 = vdwg.mxu0
    %v278 = vxor.u32 %v273, 2147483648
    %v279 = vmul.f32 %v278, 1.442695
    %v280 = vpow.pop %v279
    %v281 = vadd.f32 %v280, 1.0
    %v282 = vrcp.pop %v281
    %v283 = vmul.f32 1.0, %v282
    %284 = vst [vmem:[#allocation7] sm:$0xff] %v283
    // Predicated region
    $region30: #{_mlp_vec_padded.1} parent=1 // pred_check
      _
    $region31: #{_mlp_vec_padded.1} parent=1 // pred_check_branch
      %286 = sbr.rel (0) target = $region33
    $region32: #{_mlp_vec_padded.1} parent=1 // pred_region
      %s288 = ssub.s32 128, 128
      %289 = vsyncadd [#allocation4], %s288
      %s291 = sshll.u32 [#allocation7], 4
      %s292 = int_to_ptr.vmem [resolvable:$true] %s291
      %294 = dma.vmem_to_hbm [thread:$0]  %s292, 128, %s5, [#allocation4]
    $region33: #{_mlp_vec_padded.1} parent=1 // pred_fallthru
      _
    // Predicated region
    $region34: #{_mlp_vec_padded.1} parent=1 // pred_check
      _
    $region35: #{_mlp_vec_padded.1} parent=1 // pred_check_branch
      %296 = sbr.rel (0) target = $region37
    $region36: #{_mlp_vec_padded.1} parent=1 // pred_region
      %297 = dma.done [#allocation4], 128
    $region37: #{_mlp_vec_padded.1} parent=1 // pred_fallthru
      _
    %298 = vsyncpa [#allocation3], 1
    %299 = vsyncpa [#allocation6], 1
    %300 = vsyncpa [#allocation4], 1

</llo_original>
